<compile_context>
chip_gen: v7x
topology: tpu7x:2x2x1
jax: 0.10.0
libtpu: 0.0.40
codegen_flags: <defaults>
</compile_context>

<pallas_src>
import functools

import jax
import jax.numpy as jnp
from jax.experimental import pallas as pl
from jax.experimental.pallas import tpu as pltpu


def linear_kernel(x_ref, w_ref, b_ref, o_ref):
    # x_ref: (TB, 1)  w_ref: (1, OUT_PAD)  b_ref: (1, OUT_PAD)  o_ref: (TB, OUT_PAD)
    # Broadcast FMA on the VPU: y[b, o] = x[b, 0] * w[0, o] + b[0, o]
    o_ref[...] = x_ref[...] * w_ref[...] + b_ref[...]


def _round_up(n, m):
    return ((n + m - 1) // m) * m


@functools.partial(jax.jit, static_argnames=("tb_max",))
def linear_forward(x, weight, bias, *, tb_max=1024):
    """x: (B, in_features=1); weight: (out, in); bias: (out,). Returns (B, out)."""
    B, in_f = x.shape
    out_f, _ = weight.shape

    # Lane-dense parameter layout: a single 128-lane-padded row each for the
    # weight column and the bias (padding lanes are zero, sliced off after).
    out_pad = max(128, _round_up(out_f, 128))
    w_row = jnp.zeros((1, out_pad), jnp.float32).at[0, :out_f].set(
        weight[:, 0].astype(jnp.float32))
    b_row = jnp.zeros((1, out_pad), jnp.float32).at[0, :out_f].set(
        bias.astype(jnp.float32))

    # Batch tiling: one full-extent block when the batch is small, otherwise
    # tb_max-row tiles pipelined over a 1-D "parallel" grid.
    tb = tb_max if B >= tb_max else _round_up(B, 8)
    b_pad = _round_up(B, tb)
    n_tiles = b_pad // tb

    x_f32 = x.astype(jnp.float32)
    if b_pad == B:
        x_p = x_f32                               # no padding copy needed
    else:
        x_p = jnp.zeros((b_pad, in_f), jnp.float32).at[:B].set(x_f32)

    if n_tiles == 1:
        # Tiny case: no grid, no pipelining machinery — single VMEM-resident call.
        y_pad = pl.pallas_call(
            linear_kernel,
            out_shape=jax.ShapeDtypeStruct((b_pad, out_pad), jnp.float32),
            in_specs=[
                pl.BlockSpec(memory_space=pltpu.MemorySpace.VMEM),
                pl.BlockSpec(memory_space=pltpu.MemorySpace.VMEM),
                pl.BlockSpec(memory_space=pltpu.MemorySpace.VMEM),
            ],
            out_specs=pl.BlockSpec(memory_space=pltpu.MemorySpace.VMEM),
        )(x_p, w_row, b_row)
    else:
        # Batch-tiled case: double-buffered pipeline over the batch axis,
        # parameters resident (same (0,0) block every step -> no re-fetch).
        y_pad = pl.pallas_call(
            linear_kernel,
            out_shape=jax.ShapeDtypeStruct((b_pad, out_pad), jnp.float32),
            grid=(n_tiles,),
            in_specs=[
                pl.BlockSpec((tb, in_f), lambda i: (i, 0)),
                pl.BlockSpec((1, out_pad), lambda i: (0, 0)),
                pl.BlockSpec((1, out_pad), lambda i: (0, 0)),
            ],
            out_specs=pl.BlockSpec((tb, out_pad), lambda i: (i, 0)),
            compiler_params=pltpu.CompilerParams(
                dimension_semantics=("parallel",),
            ),
        )(x_p, w_row, b_row)

    # Slice away batch padding and the lane padding of the output.
    return y_pad[:B, :out_f]


if __name__ == "__main__":
    in_features, out_features = 1, 10
    weight = jnp.full((out_features, in_features), 3.123134, dtype=jnp.float32)
    bias = jnp.full((out_features,), 1.123123, dtype=jnp.float32)

    key = jax.random.PRNGKey(0)

    # Case 1: tiny batch (single-block, no-grid path).
    x_small = jax.random.normal(key, (8, in_features), dtype=jnp.float32)
    y_small = jax.block_until_ready(linear_forward(x_small, weight, bias))
    y_small_ref = x_small @ weight.T + bias
    assert y_small.shape == (8, out_features)
    assert jnp.allclose(y_small, y_small_ref, atol=1e-5, rtol=1e-5)

    # Case 2: batch that does not divide the tile — exercises the tiled
    # ("parallel" grid) path plus batch padding/slicing, still small shapes.
    x_med = jax.random.normal(jax.random.PRNGKey(1), (40, in_features),
                              dtype=jnp.float32)
    y_med = jax.block_until_ready(
        linear_forward(x_med, weight, bias, tb_max=16))
    y_med_ref = x_med @ weight.T + bias
    assert y_med.shape == (40, out_features)
    assert jnp.allclose(y_med, y_med_ref, atol=1e-5, rtol=1e-5)

    print("KERNEL_OK")
</pallas_src>

<mosaic_0001>
module attributes {stable_mosaic.version = 11 : i64} {
  func.func @linear_kernel(%arg0: memref<8x1xf32, #tpu.memory_space<vmem>>, %arg1: memref<1x128xf32, #tpu.memory_space<vmem>>, %arg2: memref<1x128xf32, #tpu.memory_space<vmem>>, %arg3: memref<8x128xf32, #tpu.memory_space<vmem>>) attributes {dimension_semantics = [], scalar_prefetch = 0 : i64, scratch_operands = 0 : i64, tpu.core_type = #tpu.core_type<tc>} {
    %c0 = arith.constant 0 : index
    %c0_0 = arith.constant 0 : index
    %0 = vector.load %arg0[%c0, %c0_0] : memref<8x1xf32, #tpu.memory_space<vmem>>, vector<8x1xf32>
    %c0_1 = arith.constant 0 : index
    %c0_2 = arith.constant 0 : index
    %1 = vector.load %arg1[%c0_1, %c0_2] : memref<1x128xf32, #tpu.memory_space<vmem>>, vector<1x128xf32>
    %2 = vector.broadcast %0 : vector<8x1xf32> to vector<8x128xf32>
    %3 = vector.broadcast %1 : vector<1x128xf32> to vector<8x128xf32>
    %4 = arith.mulf %2, %3 : vector<8x128xf32>
    %c0_3 = arith.constant 0 : index
    %c0_4 = arith.constant 0 : index
    %5 = vector.load %arg2[%c0_3, %c0_4] : memref<1x128xf32, #tpu.memory_space<vmem>>, vector<1x128xf32>
    %6 = vector.broadcast %5 : vector<1x128xf32> to vector<8x128xf32>
    %7 = arith.addf %4, %6 : vector<8x128xf32>
    %c0_5 = arith.constant 0 : index
    %c0_6 = arith.constant 0 : index
    %8 = vector.load %arg3[%c0_5, %c0_6] : memref<8x128xf32, #tpu.memory_space<vmem>>, vector<8x128xf32>
    tpu.vector_store %arg3[%c0_5, %c0_6], %7 {strides = array<i32>} : memref<8x128xf32, #tpu.memory_space<vmem>>, vector<8x128xf32>,
    return
  }
}

</mosaic_0001>

<llo_original>
// kernel: linear_forward.1
$region0: #{linear_forward.1}
  #allocation0 [shape = 'u32[]', space=smem, size = 0x4, offset = 0x4, fixed_abs, tag = 'smem constant byte address 0x4 - core index']
  #allocation1 [shape = 'u32[144,128]{1,0:T(1,128)}', space=vmem, size = 0x12000, scoped, tag = 'internal scratch']
  %s0 = inlined_call_operand.vmem [shape: f32[8,1], index: 0, kind: input, shape index: {}]
  %s1 = inlined_call_operand.vmem [shape: f32[1,128], index: 1, kind: input, shape index: {}]
  %s2 = inlined_call_operand.vmem [shape: f32[1,128], index: 2, kind: input, shape index: {}]
  %s3 = inlined_call_operand.hbm [shape: f32[8,128], index: 3, kind: output, shape index: {}]
  %s4 = sld [smem:[#allocation0]]
  $region22: #{linear_forward.1} parent=0
    _
  %s6 = ssub.s32 1, %s4
  %s7 = scalar_select 0, %s6, %s4
  $region1: #{linear_forward.1} parent=0
    #allocation2 [shape = 'u8[4096]{0}', space=vmem, size = 0x1000, scoped, tag = 'output window, operand 0, single buffered']
    #allocation3 [shape = 's32[1]{0}', space=sflag, size = 0x4, scoped, tag = 'scoped memory for linear_forward.1']
    %8 = vsyncpa [#allocation3], 0
    // Predicated region
    $region2: #{linear_forward.1} parent=1 // pred_check
      _
    $region3: #{linear_forward.1} parent=1 // pred_check_branch
      %10 = sbr.rel (0) target = $region5
    $region4: #{linear_forward.1} parent=1 // pred_region
      _
    $region5: #{linear_forward.1} parent=1 // pred_fallthru
      _
    // Predicated region
    $region6: #{linear_forward.1} parent=1 // pred_check
      _
    $region7: #{linear_forward.1} parent=1 // pred_check_branch
      %12 = sbr.rel (0) target = $region9
    $region8: #{linear_forward.1} parent=1 // pred_region
      _
    $region9: #{linear_forward.1} parent=1 // pred_fallthru
      _
    // Predicated region
    $region10: #{linear_forward.1} parent=1 // pred_check
      _
    $region11: #{linear_forward.1} parent=1 // pred_check_branch
      %14 = sbr.rel (0) target = $region13
    $region12: #{linear_forward.1} parent=1 // pred_region
      _
    $region13: #{linear_forward.1} parent=1 // pred_fallthru
      _
    %v15 = vld [vmem:[%s0] sm:$0xff]
    %v16 = vld [vmem:[%s1] sm:$0x1]
    %18 = vset.pattern.permute.xlu0 0
    %19 = vperm.xlu0 %18, %v15
    %v20 = vpop.permute.xlu0 %19
    %v23 = vlaneseq
    %v24 = vshrl.u32 %v23, 7
    %v25 = vsub.s32 0, %v24
    %v26 = vrot.slane %v16, %v25
    %v28 = vmul.f32 %v20, %v26
    %v29 = vld [vmem:[%s2] sm:$0x1]
    %v31 = vlaneseq
    %v32 = vshrl.u32 %v31, 7
    %v33 = vsub.s32 0, %v32
    %v34 = vrot.slane %v29, %v33
    %v36 = vadd.f32 %v28, %v34
    %37 = vst [vmem:[#allocation2] sm:$0xff] %v36
    // Predicated region
    $region14: #{linear_forward.1} parent=1 // pred_check
      _
    $region15: #{linear_forward.1} parent=1 // pred_check_branch
      %39 = sbr.rel (0) target = $region17
    $region16: #{linear_forward.1} parent=1 // pred_region
      %s41 = ssub.s32 128, 128
      %42 = vsyncadd [#allocation3], %s41
      %s44 = sshll.u32 [#allocation2], 4
      %s45 = int_to_ptr.vmem [resolvable:$true] %s44
      %47 = dma.vmem_to_hbm [thread:$0]  %s45, 128, %s3, [#allocation3]
    $region17: #{linear_forward.1} parent=1 // pred_fallthru
      _
    // Predicated region
    $region18: #{linear_forward.1} parent=1 // pred_check
      _
    $region19: #{linear_forward.1} parent=1 // pred_check_branch
      %49 = sbr.rel (0) target = $region21
    $region20: #{linear_forward.1} parent=1 // pred_region
      %50 = dma.done [#allocation3], 128
    $region21: #{linear_forward.1} parent=1 // pred_fallthru
      _
    %51 = vsyncpa [#allocation3], 1

</llo_original>
